<compile_context>
chip_gen: v7x
topology: tpu7x:2x2x1
jax: 0.10.0
libtpu: 0.0.40
codegen_flags: <defaults>
</compile_context>

<pallas_src>
import jax
import jax.numpy as jnp
from jax import lax
from jax.experimental import pallas as pl
from jax.experimental.pallas import tpu as pltpu

_LANE = 128  # TPU lane width; pad the slot axis to this for lane-dense stores


def _round_up(x, m):
    return ((x + m - 1) // m) * m


# ----------------------------------------------------------------------------
# mean_pooling: sum(emb * mask) over seq / clamp(sum(mask), 1e-9)
# Grid: (S tiles ["parallel"], Ts tiles ["arbitrary" reduction]).
# The denominator is a tiny [S] vector computed in the wrapper; the kernel
# accumulates the masked sum into the resident output block and scales at the
# last Ts step.
# ----------------------------------------------------------------------------
def _mean_pooling_kernel(emb_ref, mask_ref, invden_ref, out_ref):
    j = pl.program_id(1)

    @pl.when(j == 0)
    def _():
        out_ref[...] = jnp.zeros_like(out_ref)

    mask = mask_ref[...].astype(jnp.float32)                          # [st, tt]
    part = jnp.sum(emb_ref[...].astype(jnp.float32) * mask[:, :, None], axis=1)
    out_ref[...] += part                                              # [st, H]

    @pl.when(j == pl.num_programs(1) - 1)
    def _():
        out_ref[...] *= invden_ref[...]                               # [st, 1]


def mean_pooling(token_embeddings, attention_mask, *, s_tile=16, t_tile=128):
    S, Ts, H = token_embeddings.shape
    mask_f = attention_mask.astype(jnp.float32)
    # Tiny [S, 1] vector: keep it out of the kernel (no in-kernel divide).
    inv_den = 1.0 / jnp.maximum(jnp.sum(mask_f, axis=1, keepdims=True), 1e-9)

    st = min(s_tile, _round_up(S, 8))
    S_pad = _round_up(S, st)
    tt = Ts if Ts <= t_tile else t_tile          # if tiling Ts, tt is 128-aligned
    Ts_pad = _round_up(Ts, tt)

    if S_pad != S or Ts_pad != Ts:
        # Zero-padded mask keeps the reduction exact; padded slot rows pool to 0
        # and are sliced off below.
        token_embeddings = jnp.pad(
            token_embeddings, ((0, S_pad - S), (0, Ts_pad - Ts), (0, 0)))
        mask_f = jnp.pad(mask_f, ((0, S_pad - S), (0, Ts_pad - Ts)))
        inv_den = jnp.pad(inv_den, ((0, S_pad - S), (0, 0)))

    out = pl.pallas_call(
        _mean_pooling_kernel,
        out_shape=jax.ShapeDtypeStruct((S_pad, H), jnp.float32),
        grid=(S_pad // st, Ts_pad // tt),
        in_specs=[pl.BlockSpec((st, tt, H), lambda i, j: (i, j, 0)),
                  pl.BlockSpec((st, tt), lambda i, j: (i, j)),
                  pl.BlockSpec((st, 1), lambda i, j: (i, 0))],
        out_specs=pl.BlockSpec((st, H), lambda i, j: (i, 0)),
        compiler_params=pltpu.CompilerParams(
            dimension_semantics=("parallel", "arbitrary"),
            vmem_limit_bytes=32 * 1024 * 1024),
    )(token_embeddings, mask_f, inv_den)
    return out[:S]


# ----------------------------------------------------------------------------
# Batch-invariant slot-side precompute for 'wdot':
#   Bilinear(H, H, 1): ret[b,t,s] = tok[b,t] @ W @ slot[s] + b
#   =>  slotT_eff[h, s] = sum_k W[h, k] * slot[s, k]   (lane-dense [H, S_pad])
# Tiled over output rows so the weight block stays small at large H; emits bf16
# directly so the hot kernel consumes a ready-made operand (no wrapper .T/pad).
# ----------------------------------------------------------------------------
def _slot_w_kernel(w_ref, slot_ref, out_ref):
    out_ref[...] = lax.dot_general(
        w_ref[...], slot_ref[...],
        dimension_numbers=(((1,), (1,)), ((), ())),     # contract last dims
        preferred_element_type=jnp.float32).astype(out_ref.dtype)


def _slot_bilinear_precompute(slot_pad_bf16, w_bf16, *, th=256):
    H = w_bf16.shape[0]
    S_pad = slot_pad_bf16.shape[0]
    th = min(th, _round_up(H, 8))
    n_tiles = pl.cdiv(H, th)
    out = pl.pallas_call(
        _slot_w_kernel,
        out_shape=jax.ShapeDtypeStruct((n_tiles * th, S_pad), jnp.bfloat16),
        grid=(n_tiles,),
        in_specs=[pl.BlockSpec((th, H), lambda i: (i, 0)),
                  pl.BlockSpec((S_pad, H), lambda i: (0, 0))],
        out_specs=pl.BlockSpec((th, S_pad), lambda i: (i, 0)),
        compiler_params=pltpu.CompilerParams(
            dimension_semantics=("parallel",),
            vmem_limit_bytes=32 * 1024 * 1024),
    )(w_bf16, slot_pad_bf16)
    return out[:H]                                      # [H, S_pad] bf16


# ----------------------------------------------------------------------------
# Hot per-token kernels (tokens flattened to M = B*T rows, M-tiled grid).
# bf16 streaming operands, f32 accumulation, lane-dense (S_pad) output.
# ----------------------------------------------------------------------------
def _score_matmul_kernel(tok_ref, slotT_ref, out_ref):
    # 'dot': pure load -> vmatmul -> store (no zero-bias add).
    out_ref[...] = jnp.dot(tok_ref[...], slotT_ref[...],
                           preferred_element_type=jnp.float32).astype(out_ref.dtype)


def _score_matmul_bias_kernel(tok_ref, slotT_ref, b_ref, out_ref):
    acc = jnp.dot(tok_ref[...], slotT_ref[...], preferred_element_type=jnp.float32)
    out_ref[...] = (acc + b_ref[0]).astype(out_ref.dtype)


def _score_ff_kernel(tok_ref, wt_ref, ss_ref, b_ref, out_ref):
    # Linear(2H,1) on cat([tok, slot]) == tok·w_t + slot·w_s + b.
    # Kept off the MXU: VPU multiply + XLU reduce + broadcast add.
    tok = tok_ref[...].astype(jnp.float32)
    wt = wt_ref[...].astype(jnp.float32)
    ts = jnp.sum(tok * wt, axis=-1, keepdims=True)                    # [tm, 1]
    out_ref[...] = (ts + ss_ref[...] + b_ref[0]).astype(out_ref.dtype)


def _run_score(kernel, tok2d, extra_inputs, extra_specs, S_pad, *, tm=1024):
    M, H = tok2d.shape
    tm_eff = min(tm, _round_up(M, 8))
    # With enough rows, keep >= 2 M-tiles so both v7x TensorCores get work.
    if M > 1024 and pl.cdiv(M, tm_eff) < 2:
        tm_eff = _round_up(pl.cdiv(M, 2), 8)
    n_tiles = pl.cdiv(M, tm_eff)
    M_out = n_tiles * tm_eff      # only the OUTPUT carries row padding; the tok
    #                              stream is consumed as-is (no jnp.pad copy).
    vmem_bytes = min(48 * 1024 * 1024,
                     max(16 * 1024 * 1024,
                         2 * tm_eff * H * 2        # double-buffered bf16 tok tiles
                         + 2 * tm_eff * S_pad * 4  # double-buffered f32 out tiles
                         + H * S_pad * 2           # slot-side operand
                         + (2 << 20)))             # slack (ff extras, spills)
    return pl.pallas_call(
        kernel,
        out_shape=jax.ShapeDtypeStruct((M_out, S_pad), jnp.float32),
        grid=(n_tiles,),
        in_specs=[pl.BlockSpec((tm_eff, H), lambda i: (i, 0))] + extra_specs,
        out_specs=pl.BlockSpec((tm_eff, S_pad), lambda i: (i, 0)),
        compiler_params=pltpu.CompilerParams(
            dimension_semantics=("parallel",),
            vmem_limit_bytes=vmem_bytes),
    )(tok2d, *extra_inputs)


class BaseScorerPallas:
    """JAX/Pallas re-implementation of BaseScorer's scoring heads."""

    def __init__(self, hidden_size, model_style, key):
        self.model_style = model_style
        self.H = hidden_size
        k1, k2 = jax.random.split(key, 2)
        if model_style == 'ff':
            # torch.nn.Linear(2H, 1): weight [1, 2H], bias [1]
            w = jax.random.normal(k1, (2 * hidden_size,), jnp.float32) * 0.02
            self.w_tok = w[:hidden_size]            # [H]
            self.w_slot = w[hidden_size:]           # [H]
            self.bias = jax.random.normal(k2, (1,), jnp.float32) * 0.02
        elif model_style == 'wdot':
            # torch.nn.Bilinear(H, H, 1): weight [1, H, H], bias [1]
            self.w = jax.random.normal(k1, (hidden_size, hidden_size), jnp.float32) * 0.02
            self.bias = jax.random.normal(k2, (1,), jnp.float32) * 0.02
        # Batch-invariant slot-side operand cache (re-used across forward calls).
        self._slot_cache_key = None
        self._slot_cache = None

    def _prepare_slots(self, slot_vectors):
        key = (self.model_style, id(slot_vectors))
        if self._slot_cache_key == key:
            return self._slot_cache
        S, H = slot_vectors.shape
        S_pad = _round_up(S, _LANE)
        slot_pad = jnp.pad(slot_vectors, ((0, S_pad - S), (0, 0))).astype(jnp.bfloat16)
        if self.model_style == 'dot':
            slot_side = slot_pad.T                                    # [H, S_pad] bf16
        elif self.model_style == 'wdot':
            slot_side = _slot_bilinear_precompute(
                slot_pad, self.w.astype(jnp.bfloat16))                # [H, S_pad] bf16
        else:  # 'ff': slot-side scalar per slot, kept in f32 (cold, tiny)
            slot_side = jnp.pad(slot_vectors @ self.w_slot,
                                (0, S_pad - S))[None, :]              # [1, S_pad] f32
        self._slot_cache_key = key
        self._slot_cache = (S_pad, slot_side)
        return self._slot_cache

    def forward(self, token_level_outputs, slot_vectors):
        B, T, H = token_level_outputs.shape
        S = slot_vectors.shape[0]
        S_pad, slot_side = self._prepare_slots(slot_vectors)

        # bf16 streaming operand (free leading-dim collapse; in a real model the
        # PLM's last_hidden_state is already bf16, so the cast fuses upstream).
        tok2d = token_level_outputs.reshape(B * T, H).astype(jnp.bfloat16)

        smem_scalar = pl.BlockSpec(memory_space=pltpu.MemorySpace.SMEM)

        if self.model_style == 'dot':
            extra = [slot_side]
            specs = [pl.BlockSpec((H, S_pad), lambda i: (0, 0))]
            out = _run_score(_score_matmul_kernel, tok2d, extra, specs, S_pad)
        elif self.model_style == 'wdot':
            extra = [slot_side, self.bias]
            specs = [pl.BlockSpec((H, S_pad), lambda i: (0, 0)), smem_scalar]
            out = _run_score(_score_matmul_bias_kernel, tok2d, extra, specs, S_pad)
        else:  # 'ff'
            wt = self.w_tok.astype(jnp.bfloat16)[None, :]             # [1, H] bf16
            extra = [wt, slot_side, self.bias]
            specs = [pl.BlockSpec((1, H), lambda i: (0, 0)),
                     pl.BlockSpec((1, S_pad), lambda i: (0, 0)),
                     smem_scalar]
            out = _run_score(_score_ff_kernel, tok2d, extra, specs, S_pad)

        # TODO(synk): downstream consumers could take the lane-dense [*, S_pad]
        # scores with a column mask and skip this slice's extra HBM pass.
        return out[:B * T, :S].reshape(B, T, S)


if __name__ == "__main__":
    key = jax.random.PRNGKey(0)
    k_tok, k_slot, k_mask, k_p1, k_p2, k_p3 = jax.random.split(key, 6)

    B, T, H = 2, 8, 32            # batch, utterance seq len, hidden size
    S, Ts = 10, 4                 # 10 slots for 'PlayMusic', slot-name seq len

    # Synthetic PLM outputs (last_hidden_state) for the utterance.
    token_level_outputs = jax.random.normal(k_tok, (B, T, H), jnp.float32)

    # Synthetic PLM outputs for the slot names + padding attention mask,
    # pooled with the Pallas mean_pooling kernel (non-BERT checkpoint branch).
    slot_token_embeddings = jax.random.normal(k_slot, (S, Ts, H), jnp.float32)
    lens = 1 + (jax.random.randint(k_mask, (S,), 0, Ts))
    attention_mask = (jnp.arange(Ts)[None, :] < lens[:, None]).astype(jnp.float32)
    slot_vectors = jax.block_until_ready(
        mean_pooling(slot_token_embeddings, attention_mask))

    # Reference mean pooling
    m = attention_mask[:, :, None]
    slot_ref = (slot_token_embeddings * m).sum(1) / jnp.clip(m.sum(1), 1e-9)
    assert jnp.allclose(slot_vectors, slot_ref, atol=1e-5, rtol=1e-5)

    # Plain-JAX references mirror the kernels' precision chain (bf16 streaming
    # operands, f32 accumulation), matching the module's math.
    f32 = lambda x: x.astype(jnp.float32)
    tok_b = f32(token_level_outputs.astype(jnp.bfloat16))
    slot_b = f32(slot_vectors.astype(jnp.bfloat16))

    ok = True
    for style, pk in (('dot', k_p1), ('wdot', k_p2), ('ff', k_p3)):
        scorer = BaseScorerPallas(H, style, pk)
        out = jax.block_until_ready(scorer.forward(token_level_outputs, slot_vectors))
        assert out.shape == (B, T, S)
        # Second call exercises the batch-invariant slot-side cache.
        out2 = jax.block_until_ready(scorer.forward(token_level_outputs, slot_vectors))
        assert jnp.allclose(out, out2)

        if style == 'dot':
            ref = jnp.einsum('bth,sh->bts', tok_b, slot_b)
            tol = 1e-3
        elif style == 'wdot':
            w_b = f32(scorer.w.astype(jnp.bfloat16))
            ws_b = f32(jnp.einsum('hk,sk->hs', w_b, slot_b).astype(jnp.bfloat16))
            ref = jnp.einsum('bth,hs->bts', tok_b, ws_b) + scorer.bias[0]
            tol = 2e-3
        else:
            wt_b = f32(scorer.w_tok.astype(jnp.bfloat16))
            ref = (jnp.einsum('bth,h->bt', tok_b, wt_b)[:, :, None]
                   + (slot_vectors @ scorer.w_slot)[None, None, :]
                   + scorer.bias[0])
            tol = 1e-3
        ok = ok and bool(jnp.allclose(out, ref, atol=tol, rtol=tol))

    if ok:
        print("KERNEL_OK")
</pallas_src>

<mosaic_0001>
module attributes {stable_mosaic.version = 11 : i64} {
  func.func @_mean_pooling_kernel(%arg0: i32, %arg1: i32, %arg2: memref<16x4x32xf32, #tpu.memory_space<vmem>>, %arg3: memref<16x4xf32, #tpu.memory_space<vmem>>, %arg4: memref<16x1xf32, #tpu.memory_space<vmem>>, %arg5: memref<16x32xf32, #tpu.memory_space<vmem>>) attributes {dimension_semantics = [#tpu.dimension_semantics<parallel>, #tpu.dimension_semantics<arbitrary>], iteration_bounds = array<i64: 1, 1>, scalar_prefetch = 0 : i64, scratch_operands = 0 : i64, tpu.core_type = #tpu.core_type<tc>, window_params = [{transform_indices = @transform_0, window_bounds = array<i64: 16, 4, 32>}, {transform_indices = @transform_1, window_bounds = array<i64: 16, 4>}, {transform_indices = @transform_2, window_bounds = array<i64: 16, 1>}, {transform_indices = @transform_3, window_bounds = array<i64: 16, 32>}]} {
    %c0_i32 = arith.constant 0 : i32
    %0 = arith.cmpi eq, %arg1, %c0_i32 : i32
    %1 = arith.extui %0 : i1 to i32
    %c0_i32_0 = arith.constant 0 : i32
    %2 = arith.cmpi ne, %1, %c0_i32_0 : i32
    scf.if %2 {
      %cst_11 = arith.constant 0.000000e+00 : f32
      %15 = vector.broadcast %cst_11 : f32 to vector<16x32xf32>
      %c0_12 = arith.constant 0 : index
      %c0_13 = arith.constant 0 : index
      %16 = vector.load %arg5[%c0_12, %c0_13] : memref<16x32xf32, #tpu.memory_space<vmem>>, vector<16x32xf32>
      tpu.vector_store %arg5[%c0_12, %c0_13], %15 {strides = array<i32>} : memref<16x32xf32, #tpu.memory_space<vmem>>, vector<16x32xf32>,
    } else {
    }
    %c0 = arith.constant 0 : index
    %c0_1 = arith.constant 0 : index
    %3 = vector.load %arg3[%c0, %c0_1] : memref<16x4xf32, #tpu.memory_space<vmem>>, vector<16x4xf32>
    %c0_2 = arith.constant 0 : index
    %c0_3 = arith.constant 0 : index
    %c0_4 = arith.constant 0 : index
    %4 = vector.load %arg2[%c0_2, %c0_3, %c0_4] : memref<16x4x32xf32, #tpu.memory_space<vmem>>, vector<16x4x32xf32>
    %5 = vector.shape_cast %3 : vector<16x4xf32> to vector<16x4x1xf32>
    %6 = vector.broadcast %5 : vector<16x4x1xf32> to vector<16x4x32xf32>
    %7 = arith.mulf %4, %6 : vector<16x4x32xf32>
    %cst = arith.constant dense<0.000000e+00> : vector<16x32xf32>
    %8 = vector.multi_reduction <add>, %7, %cst [1] : vector<16x4x32xf32> to vector<16x32xf32>
    %c0_5 = arith.constant 0 : index
    %c0_6 = arith.constant 0 : index
    %9 = vector.load %arg5[%c0_5, %c0_6] : memref<16x32xf32, #tpu.memory_space<vmem>>, vector<16x32xf32>
    %10 = arith.addf %9, %8 : vector<16x32xf32>
    %c0_7 = arith.constant 0 : index
    %c0_8 = arith.constant 0 : index
    %11 = vector.load %arg5[%c0_7, %c0_8] : memref<16x32xf32, #tpu.memory_space<vmem>>, vector<16x32xf32>
    tpu.vector_store %arg5[%c0_7, %c0_8], %10 {strides = array<i32>} : memref<16x32xf32, #tpu.memory_space<vmem>>, vector<16x32xf32>,
    %c0_i32_9 = arith.constant 0 : i32
    %12 = arith.cmpi eq, %arg1, %c0_i32_9 : i32
    %13 = arith.extui %12 : i1 to i32
    %c0_i32_10 = arith.constant 0 : i32
    %14 = arith.cmpi ne, %13, %c0_i32_10 : i32
    scf.if %14 {
      %c0_11 = arith.constant 0 : index
      %c0_12 = arith.constant 0 : index
      %15 = vector.load %arg5[%c0_11, %c0_12] : memref<16x32xf32, #tpu.memory_space<vmem>>, vector<16x32xf32>
      %c0_13 = arith.constant 0 : index
      %c0_14 = arith.constant 0 : index
      %16 = vector.load %arg4[%c0_13, %c0_14] : memref<16x1xf32, #tpu.memory_space<vmem>>, vector<16x1xf32>
      %17 = vector.broadcast %16 : vector<16x1xf32> to vector<16x32xf32>
      %18 = arith.mulf %15, %17 : vector<16x32xf32>
      %c0_15 = arith.constant 0 : index
      %c0_16 = arith.constant 0 : index
      %19 = vector.load %arg5[%c0_15, %c0_16] : memref<16x32xf32, #tpu.memory_space<vmem>>, vector<16x32xf32>
      tpu.vector_store %arg5[%c0_15, %c0_16], %18 {strides = array<i32>} : memref<16x32xf32, #tpu.memory_space<vmem>>, vector<16x32xf32>,
    } else {
    }
    return
  }
  func.func @transform_0(%arg0: i32, %arg1: i32) -> (i32, i32, i32) {
    %c0_i32 = arith.constant 0 : i32
    %c0_i32_0 = arith.constant 0 : i32
    return %arg0, %arg1, %c0_i32 : i32, i32, i32
  }
  func.func @transform_1(%arg0: i32, %arg1: i32) -> (i32, i32) {
    %c0_i32 = arith.constant 0 : i32
    return %arg0, %arg1 : i32, i32
  }
  func.func @transform_2(%arg0: i32, %arg1: i32) -> (i32, i32) {
    %c0_i32 = arith.constant 0 : i32
    %c0_i32_0 = arith.constant 0 : i32
    return %arg0, %c0_i32 : i32, i32
  }
  func.func @transform_3(%arg0: i32, %arg1: i32) -> (i32, i32) {
    %c0_i32 = arith.constant 0 : i32
    %c0_i32_0 = arith.constant 0 : i32
    return %arg0, %c0_i32 : i32, i32
  }
}

</mosaic_0001>

<llo_original>
// kernel: tpu_custom_call.1
$region0: #{tpu_custom_call.1}
  #allocation0 [shape = 'u32[]', space=smem, size = 0x4, offset = 0x4, fixed_abs, tag = 'smem constant byte address 0x4 - core index']
  #allocation1 [shape = 'u32[144,128]{1,0:T(1,128)}', space=vmem, size = 0x12000, scoped, tag = 'internal scratch']
  %s0 = inlined_call_operand.hbm [shape: f32[16,4,32], index: 0, kind: input, shape index: {}]
  %s1 = inlined_call_operand.vmem [shape: f32[16,4], index: 1, kind: input, shape index: {}]
  %s2 = inlined_call_operand.vmem [shape: f32[16,1], index: 2, kind: input, shape index: {}]
  %s3 = inlined_call_operand.hbm [shape: f32[16,32], index: 3, kind: output, shape index: {}]
  %s4 = sld [smem:[#allocation0]]
  $region34: #{tpu_custom_call.1} parent=0
    _
  %s6 = ssub.s32 1, %s4
  %s7 = scalar_select 0, %s6, %s4
  $region1: #{tpu_custom_call.1} parent=0
    #allocation2 [shape = 'u8[32768]{0}', space=vmem, size = 0x8000, scoped, tag = 'input window, operand 0, single buffered']
    #allocation3 [shape = 's32[1]{0}', space=sflag, size = 0x4, scoped, tag = 'scoped memory for tpu_custom_call.1']
    #allocation4 [shape = 's32[1]{0}', space=sflag, size = 0x4, scoped, tag = 'scoped memory for tpu_custom_call.1']
    #allocation5 [shape = 'u8[8192]{0}', space=vmem, size = 0x2000, scoped, tag = 'output window, operand 0, single buffered']
    %8 = vsyncpa [#allocation3], 0
    %9 = vsyncpa [#allocation4], 0
    // Predicated region
    $region2: #{tpu_custom_call.1} parent=1 // pred_check
      _
    $region3: #{tpu_custom_call.1} parent=1 // pred_check_branch
      %11 = sbr.rel (0) target = $region5
    $region4: #{tpu_custom_call.1} parent=1 // pred_region
      %s13 = ssub.s32 1024, 1024
      %14 = vsyncadd [#allocation3], %s13
      %s15 = sshll.u32 [#allocation2], 4
      %s16 = int_to_ptr.vmem [resolvable:$true] %s15
      %21 = dma.hbm_to_vmem [thread:$0]  %s0, 1024, %s16, [#allocation3], 64, 64, 4
    $region5: #{tpu_custom_call.1} parent=1 // pred_fallthru
      _
    // Predicated region
    $region6: #{tpu_custom_call.1} parent=1 // pred_check
      _
    $region7: #{tpu_custom_call.1} parent=1 // pred_check_branch
      %23 = sbr.rel (0) target = $region9
    $region8: #{tpu_custom_call.1} parent=1 // pred_region
      _
    $region9: #{tpu_custom_call.1} parent=1 // pred_fallthru
      _
    // Predicated region
    $region10: #{tpu_custom_call.1} parent=1 // pred_check
      _
    $region11: #{tpu_custom_call.1} parent=1 // pred_check_branch
      %25 = sbr.rel (0) target = $region13
    $region12: #{tpu_custom_call.1} parent=1 // pred_region
      _
    $region13: #{tpu_custom_call.1} parent=1 // pred_fallthru
      _
    // Predicated region
    $region14: #{tpu_custom_call.1} parent=1 // pred_check
      _
    $region15: #{tpu_custom_call.1} parent=1 // pred_check_branch
      %27 = sbr.rel (0) target = $region17
    $region16: #{tpu_custom_call.1} parent=1 // pred_region
      %28 = dma.done [#allocation3], 1024
    $region17: #{tpu_custom_call.1} parent=1 // pred_fallthru
      _
    %p29 = scmp.eq.s32.totalorder 0, 0
    // Predicated region
    $region18: #{tpu_custom_call.1} parent=1 // pred_check
      %p30 = pneg %p29
    $region19: #{tpu_custom_call.1} parent=1 // pred_check_branch
      %32 = sbr.rel (%p30) target = $region21
    $region20: #{tpu_custom_call.1} parent=1 // pred_region
      %vm33 = vcmask 261120
      %34 = vst.msk [vmem:[#allocation5] sm:$0xff] %vm33, 0.0
      %35 = vst.msk [vmem:[#allocation5 + $0x8] sm:$0xff] %vm33, 0.0
    $region21: #{tpu_custom_call.1} parent=1 // pred_fallthru
      _
    %v36 = vld [vmem:[%s1] sm:$0xff]
    %v37 = vld [vmem:[%s1 + $0x8] sm:$0xff]
    %v38 = vld [vmem:[#allocation2] sm:$0xf]
    %v39 = vld [vmem:[#allocation2 + $0x4] sm:$0xf]
    %v40 = vld [vmem:[#allocation2 + $0x8] sm:$0xf]
    %v41 = vld [vmem:[#allocation2 + $0xc] sm:$0xf]
    %v42 = vld [vmem:[#allocation2 + $0x10] sm:$0xf]
    %v43 = vld [vmem:[#allocation2 + $0x14] sm:$0xf]
    %v44 = vld [vmem:[#allocation2 + $0x18] sm:$0xf]
    %v45 = vld [vmem:[#allocation2 + $0x1c] sm:$0xf]
    %v46 = vld [vmem:[#allocation2 + $0x20] sm:$0xf]
    %v47 = vld [vmem:[#allocation2 + $0x24] sm:$0xf]
    %v48 = vld [vmem:[#allocation2 + $0x28] sm:$0xf]
    %v49 = vld [vmem:[#allocation2 + $0x2c] sm:$0xf]
    %v50 = vld [vmem:[#allocation2 + $0x30] sm:$0xf]
    %v51 = vld [vmem:[#allocation2 + $0x34] sm:$0xf]
    %v52 = vld [vmem:[#allocation2 + $0x38] sm:$0xf]
    %v53 = vld [vmem:[#allocation2 + $0x3c] sm:$0xf]
    %v54 = vlaneseq
    %v55 = vshrl.u32 %v54, 7
    %v56 = vsub.s32 0, %v55
    %v57 = vrot.slane %v36, %v56
    %59 = vbcast.lane.b32.xlu0 %v57, 256
    %v60 = vpop.permute.xlu0 %59
    %v61 = vlaneseq
    %v62 = vshrl.u32 %v61, 7
    %v63 = vsub.s32 1, %v62
    %v64 = vrot.slane %v36, %v63
    %66 = vbcast.lane.b32.xlu0 %v64, 256
    %v67 = vpop.permute.xlu0 %66
    %v68 = vlaneseq
    %v69 = vshrl.u32 %v68, 7
    %v70 = vsub.s32 2, %v69
    %v71 = vrot.slane %v36, %v70
    %73 = vbcast.lane.b32.xlu0 %v71, 256
    %v74 = vpop.permute.xlu0 %73
    %v75 = vlaneseq
    %v76 = vshrl.u32 %v75, 7
    %v77 = vsub.s32 3, %v76
    %v78 = vrot.slane %v36, %v77
    %80 = vbcast.lane.b32.xlu0 %v78, 256
    %v81 = vpop.permute.xlu0 %80
    %v82 = vlaneseq
    %v83 = vshrl.u32 %v82, 7
    %v84 = vsub.s32 4, %v83
    %v85 = vrot.slane %v36, %v84
    %87 = vbcast.lane.b32.xlu0 %v85, 256
    %v88 = vpop.permute.xlu0 %87
    %v89 = vlaneseq
    %v90 = vshrl.u32 %v89, 7
    %v91 = vsub.s32 5, %v90
    %v92 = vrot.slane %v36, %v91
    %94 = vbcast.lane.b32.xlu0 %v92, 256
    %v95 = vpop.permute.xlu0 %94
    %v96 = vlaneseq
    %v97 = vshrl.u32 %v96, 7
    %v98 = vsub.s32 6, %v97
    %v99 = vrot.slane %v36, %v98
    %101 = vbcast.lane.b32.xlu0 %v99, 256
    %v102 = vpop.permute.xlu0 %101
    %v103 = vlaneseq
    %v104 = vshrl.u32 %v103, 7
    %v105 = vsub.s32 7, %v104
    %v106 = vrot.slane %v36, %v105
    %108 = vbcast.lane.b32.xlu0 %v106, 256
    %v109 = vpop.permute.xlu0 %108
    %v110 = vlaneseq
    %v111 = vshrl.u32 %v110, 7
    %v112 = vsub.s32 0, %v111
    %v113 = vrot.slane %v37, %v112
    %115 = vbcast.lane.b32.xlu0 %v113, 256
    %v116 = vpop.permute.xlu0 %115
    %v117 = vlaneseq
    %v118 = vshrl.u32 %v117, 7
    %v119 = vsub.s32 1, %v118
    %v120 = vrot.slane %v37, %v119
    %122 = vbcast.lane.b32.xlu0 %v120, 256
    %v123 = vpop.permute.xlu0 %122
    %v124 = vlaneseq
    %v125 = vshrl.u32 %v124, 7
    %v126 = vsub.s32 2, %v125
    %v127 = vrot.slane %v37, %v126
    %129 = vbcast.lane.b32.xlu0 %v127, 256
    %v130 = vpop.permute.xlu0 %129
    %v131 = vlaneseq
    %v132 = vshrl.u32 %v131, 7
    %v133 = vsub.s32 3, %v132
    %v134 = vrot.slane %v37, %v133
    %136 = vbcast.lane.b32.xlu0 %v134, 256
    %v137 = vpop.permute.xlu0 %136
    %v138 = vlaneseq
    %v139 = vshrl.u32 %v138, 7
    %v140 = vsub.s32 4, %v139
    %v141 = vrot.slane %v37, %v140
    %143 = vbcast.lane.b32.xlu0 %v141, 256
    %v144 = vpop.permute.xlu0 %143
    %v145 = vlaneseq
    %v146 = vshrl.u32 %v145, 7
    %v147 = vsub.s32 5, %v146
    %v148 = vrot.slane %v37, %v147
    %150 = vbcast.lane.b32.xlu0 %v148, 256
    %v151 = vpop.permute.xlu0 %150
    %v152 = vlaneseq
    %v153 = vshrl.u32 %v152, 7
    %v154 = vsub.s32 6, %v153
    %v155 = vrot.slane %v37, %v154
    %157 = vbcast.lane.b32.xlu0 %v155, 256
    %v158 = vpop.permute.xlu0 %157
    %v159 = vlaneseq
    %v160 = vshrl.u32 %v159, 7
    %v161 = vsub.s32 7, %v160
    %v162 = vrot.slane %v37, %v161
    %164 = vbcast.lane.b32.xlu0 %v162, 256
    %v165 = vpop.permute.xlu0 %164
    %v166 = vmul.f32 %v38, %v60
    %v167 = vmul.f32 %v39, %v67
    %v168 = vmul.f32 %v40, %v74
    %v169 = vmul.f32 %v41, %v81
    %v170 = vmul.f32 %v42, %v88
    %v171 = vmul.f32 %v43, %v95
    %v172 = vmul.f32 %v44, %v102
    %v173 = vmul.f32 %v45, %v109
    %v174 = vmul.f32 %v46, %v116
    %v175 = vmul.f32 %v47, %v123
    %v176 = vmul.f32 %v48, %v130
    %v177 = vmul.f32 %v49, %v137
    %v178 = vmul.f32 %v50, %v144
    %v179 = vmul.f32 %v51, %v151
    %v180 = vmul.f32 %v52, %v158
    %v181 = vmul.f32 %v53, %v165
    %vm182 = vcmask 257024
    %v183 = vsel %vm182, %v166, 0.0
    %v184 = vrot.slane %v183, 4
    %v185 = vadd.f32 %v183, %v184
    %v186 = vrot.slane %v185, 2
    %v187 = vadd.f32 %v185, %v186
    %v188 = vrot.slane %v187, 1
    %v189 = vadd.f32 %v187, %v188
    %v190 = vsel %vm182, %v167, 0.0
    %v191 = vrot.slane %v190, 4
    %v192 = vadd.f32 %v190, %v191
    %v193 = vrot.slane %v192, 2
    %v194 = vadd.f32 %v192, %v193
    %v195 = vrot.slane %v194, 1
    %v196 = vadd.f32 %v194, %v195
    %v197 = vsel %vm182, %v168, 0.0
    %v198 = vrot.slane %v197, 4
    %v199 = vadd.f32 %v197, %v198
    %v200 = vrot.slane %v199, 2
    %v201 = vadd.f32 %v199, %v200
    %v202 = vrot.slane %v201, 1
    %v203 = vadd.f32 %v201, %v202
    %v204 = vsel %vm182, %v169, 0.0
    %v205 = vrot.slane %v204, 4
    %v206 = vadd.f32 %v204, %v205
    %v207 = vrot.slane %v206, 2
    %v208 = vadd.f32 %v206, %v207
    %v209 = vrot.slane %v208, 1
    %v210 = vadd.f32 %v208, %v209
    %v211 = vsel %vm182, %v170, 0.0
    %v212 = vrot.slane %v211, 4
    %v213 = vadd.f32 %v211, %v212
    %v214 = vrot.slane %v213, 2
    %v215 = vadd.f32 %v213, %v214
    %v216 = vrot.slane %v215, 1
    %v217 = vadd.f32 %v215, %v216
    %v218 = vsel %vm182, %v171, 0.0
    %v219 = vrot.slane %v218, 4
    %v220 = vadd.f32 %v218, %v219
    %v221 = vrot.slane %v220, 2
    %v222 = vadd.f32 %v220, %v221
    %v223 = vrot.slane %v222, 1
    %v224 = vadd.f32 %v222, %v223
    %v225 = vsel %vm182, %v172, 0.0
    %v226 = vrot.slane %v225, 4
    %v227 = vadd.f32 %v225, %v226
    %v228 = vrot.slane %v227, 2
    %v229 = vadd.f32 %v227, %v228
    %v230 = vrot.slane %v229, 1
    %v231 = vadd.f32 %v229, %v230
    %v232 = vsel %vm182, %v173, 0.0
    %v233 = vrot.slane %v232, 4
    %v234 = vadd.f32 %v232, %v233
    %v235 = vrot.slane %v234, 2
    %v236 = vadd.f32 %v234, %v235
    %v237 = vrot.slane %v236, 1
    %v238 = vadd.f32 %v236, %v237
    %v239 = vsel %vm182, %v174, 0.0
    %v240 = vrot.slane %v239, 4
    %v241 = vadd.f32 %v239, %v240
    %v242 = vrot.slane %v241, 2
    %v243 = vadd.f32 %v241, %v242
    %v244 = vrot.slane %v243, 1
    %v245 = vadd.f32 %v243, %v244
    %v246 = vsel %vm182, %v175, 0.0
    %v247 = vrot.slane %v246, 4
    %v248 = vadd.f32 %v246, %v247
    %v249 = vrot.slane %v248, 2
    %v250 = vadd.f32 %v248, %v249
    %v251 = vrot.slane %v250, 1
    %v252 = vadd.f32 %v250, %v251
    %v253 = vsel %vm182, %v176, 0.0
    %v254 = vrot.slane %v253, 4
    %v255 = vadd.f32 %v253, %v254
    %v256 = vrot.slane %v255, 2
    %v257 = vadd.f32 %v255, %v256
    %v258 = vrot.slane %v257, 1
    %v259 = vadd.f32 %v257, %v258
    %v260 = vsel %vm182, %v177, 0.0
    %v261 = vrot.slane %v260, 4
    %v262 = vadd.f32 %v260, %v261
    %v263 = vrot.slane %v262, 2
    %v264 = vadd.f32 %v262, %v263
    %v265 = vrot.slane %v264, 1
    %v266 = vadd.f32 %v264, %v265
    %v267 = vsel %vm182, %v178, 0.0
    %v268 = vrot.slane %v267, 4
    %v269 = vadd.f32 %v267, %v268
    %v270 = vrot.slane %v269, 2
    %v271 = vadd.f32 %v269, %v270
    %v272 = vrot.slane %v271, 1
    %v273 = vadd.f32 %v271, %v272
    %v274 = vsel %vm182, %v179, 0.0
    %v275 = vrot.slane %v274, 4
    %v276 = vadd.f32 %v274, %v275
    %v277 = vrot.slane %v276, 2
    %v278 = vadd.f32 %v276, %v277
    %v279 = vrot.slane %v278, 1
    %v280 = vadd.f32 %v278, %v279
    %v281 = vsel %vm182, %v180, 0.0
    %v282 = vrot.slane %v281, 4
    %v283 = vadd.f32 %v281, %v282
    %v284 = vrot.slane %v283, 2
    %v285 = vadd.f32 %v283, %v284
    %v286 = vrot.slane %v285, 1
    %v287 = vadd.f32 %v285, %v286
    %v288 = vsel %vm182, %v181, 0.0
    %v289 = vrot.slane %v288, 4
    %v290 = vadd.f32 %v288, %v289
    %v291 = vrot.slane %v290, 2
    %v292 = vadd.f32 %v290, %v291
    %v293 = vrot.slane %v292, 1
    %v294 = vadd.f32 %v292, %v293
    %v295 = vld [vmem:[#allocation5] sm:$0xff]
    %v296 = vld [vmem:[#allocation5 + $0x8] sm:$0xff]
    %vm313 = vcmask 1041409
    %v314 = vsel %vm313, %v196, %v189
    %vm315 = vcmask 1042434
    %v316 = vsel %vm315, %v203, %v314
    %vm317 = vcmask 1043459
    %v318 = vsel %vm317, %v210, %v316
    %vm319 = vcmask 1044484
    %v320 = vsel %vm319, %v217, %v318
    %vm321 = vcmask 1045509
    %v322 = vsel %vm321, %v224, %v320
    %vm323 = vcmask 1046534
    %v324 = vsel %vm323, %v231, %v322
    %vm325 = vcmask 1047559
    %v326 = vsel %vm325, %v238, %v324
    %v327 = vsel %vm313, %v252, %v245
    %v328 = vsel %vm315, %v259, %v327
    %v329 = vsel %vm317, %v266, %v328
    %v330 = vsel %vm319, %v273, %v329
    %v331 = vsel %vm321, %v280, %v330
    %v332 = vsel %vm323, %v287, %v331
    %v333 = vsel %vm325, %v294, %v332
    %v336 = vadd.f32 %v295, %v326
    %v337 = vadd.f32 %v296, %v333
    %vm338 = vcmask 261120
    %339 = vst.msk [vmem:[#allocation5] sm:$0xff] %vm338, %v336
    %340 = vst.msk [vmem:[#allocation5 + $0x8] sm:$0xff] %vm338, %v337
    // Predicated region
    $region22: #{tpu_custom_call.1} parent=1 // pred_check
      %p341 = pneg %p29
    $region23: #{tpu_custom_call.1} parent=1 // pred_check_branch
      %343 = sbr.rel (%p341) target = $region25
    $region24: #{tpu_custom_call.1} parent=1 // pred_region
      %v344 = vld [vmem:[#allocation5] sm:$0xff]
      %v345 = vld [vmem:[#allocation5 + $0x8] sm:$0xff]
      %v346 = vld [vmem:[%s2] sm:$0xff]
      %v347 = vld [vmem:[%s2 + $0x8] sm:$0xff]
      %349 = vset.pattern.permute.xlu0 0
      %350 = vperm.xlu0 %349, %v346
      %v351 = vpop.permute.xlu0 %350
      %354 = vset.pattern.permute.xlu0 0
      %355 = vperm.xlu0 %354, %v347
      %v356 = vpop.permute.xlu0 %355
      %v358 = vmul.f32 %v344, %v351
      %v359 = vmul.f32 %v345, %v356
      %360 = vst.msk [vmem:[#allocation5] sm:$0xff] %vm338, %v358
      %361 = vst.msk [vmem:[#allocation5 + $0x8] sm:$0xff] %vm338, %v359
    $region25: #{tpu_custom_call.1} parent=1 // pred_fallthru
      _
    // Predicated region
    $region26: #{tpu_custom_call.1} parent=1 // pred_check
      _
    $region27: #{tpu_custom_call.1} parent=1 // pred_check_branch
      %363 = sbr.rel (0) target = $region29
    $region28: #{tpu_custom_call.1} parent=1 // pred_region
      %s365 = ssub.s32 256, 256
      %366 = vsyncadd [#allocation4], %s365
      %s367 = sshll.u32 [#allocation5], 4
      %s368 = int_to_ptr.vmem [resolvable:$true] %s367
      %373 = dma.vmem_to_hbm [thread:$0]  %s368, 256, %s3, [#allocation4], 128, 128, 8
    $region29: #{tpu_custom_call.1} parent=1 // pred_fallthru
      _
    // Predicated region
    $region30: #{tpu_custom_call.1} parent=1 // pred_check
      _
    $region31: #{tpu_custom_call.1} parent=1 // pred_check_branch
      %375 = sbr.rel (0) target = $region33
    $region32: #{tpu_custom_call.1} parent=1 // pred_region
      %376 = dma.done [#allocation4], 256
    $region33: #{tpu_custom_call.1} parent=1 // pred_fallthru
      _
    %377 = vsyncpa [#allocation3], 1
    %378 = vsyncpa [#allocation4], 1

</llo_original>
